<compile_context>
chip_gen: v6e
topology: v6e:2x2x1
jax: 0.10.0
libtpu: 0.0.40
codegen_flags: <defaults>
</compile_context>

<pallas_src>
import functools

import jax
import jax.numpy as jnp
from jax.experimental import pallas as pl
from jax.experimental.pallas import tpu as pltpu  # noqa: F401  (TPU backend)


def _pe2_kernel(w_ref, x_ref, o_ref, *, s, seq_len):
    """w_ref: (1, max_len) raw weights; x_ref / o_ref: (B*D, seq_len)."""
    w = w_ref[...]                                             # (1, max_len)
    m = jnp.max(w, axis=-1, keepdims=True)                     # (1, 1)
    denom = jnp.sum(jnp.exp(w - m), axis=-1, keepdims=True)    # (1, 1) softmax denom over full max_len
    # softmax(w)[:, s:s+L] computed only on the needed window (static slice).
    pe = jnp.exp(w_ref[:, s:s + seq_len] - m) / denom          # (1, seq_len)
    # Broadcast the (1, L) pe row over all B*D rows (sublane broadcast).
    o_ref[...] = (x_ref[...] * pe).astype(o_ref.dtype)


def positional_encoding2_forward(x, w, t, *, max_len):
    """Pallas implementation of PositionalEncoding2.forward(x, t).

    Args:
      x: [B, D, L] float array (batch, embedding_dim, seq_len).
      w: [1, 1, max_len] positional-weight parameter.
      t: Python int time index (static, as in the PyTorch `t: int` signature).
    Returns:
      [B, D, L] array: x * softmax(w, axis=-1)[:, :, s:s+L] with s = max_len//2 - t.
    """
    B, D, L = x.shape
    s = max_len // 2 - t
    assert 0 <= s and s + L <= max_len, "window [s, s+L) must lie inside max_len"

    x2 = x.reshape(B * D, L)            # rows on sublanes, seq_len on lanes
    w2 = w.reshape(1, max_len)

    kernel = functools.partial(_pe2_kernel, s=s, seq_len=L)
    out2 = pl.pallas_call(
        kernel,
        grid=(),
        in_specs=[
            pl.BlockSpec((1, max_len), lambda: (0, 0)),
            pl.BlockSpec((B * D, L), lambda: (0, 0)),
        ],
        out_specs=pl.BlockSpec((B * D, L), lambda: (0, 0)),
        out_shape=jax.ShapeDtypeStruct((B * D, L), x.dtype),
    )(w2, x2)
    return out2.reshape(B, D, L)


def init_w(max_len):
    """Deterministic re-implementation of PositionalEncoding2.__init__."""
    pe = jnp.exp(-jnp.abs(jnp.arange(0, max_len, dtype=jnp.float32) - max_len / 2.0))
    return pe.reshape(1, 1, max_len)


if __name__ == "__main__":
    B, D, L = 2, 32, 8        # batch, embedding_dim, seq_len
    max_len = 200
    t = 3

    key = jax.random.PRNGKey(0)
    x = jax.random.normal(key, (B, D, L), jnp.float32)
    w = init_w(max_len)

    out = positional_encoding2_forward(x, w, t, max_len=max_len)
    jax.block_until_ready(out)

    # Plain-JAX reference.
    s = max_len // 2 - t
    ref = x * jax.nn.softmax(w, axis=-1)[:, :, s:s + L]
    assert out.shape == x.shape
    assert jnp.allclose(out, ref, rtol=1e-5, atol=1e-6), float(
        jnp.max(jnp.abs(out - ref))
    )

    print("KERNEL_OK")
</pallas_src>

<mosaic_0001>
module attributes {stable_mosaic.version = 11 : i64} {
  func.func @_pe2_kernel(%arg0: memref<1x200xf32, #tpu.memory_space<vmem>>, %arg1: memref<64x8xf32, #tpu.memory_space<vmem>>, %arg2: memref<64x8xf32, #tpu.memory_space<vmem>>) attributes {dimension_semantics = [], scalar_prefetch = 0 : i64, scratch_operands = 0 : i64, tpu.core_type = #tpu.core_type<tc>} {
    %c0 = arith.constant 0 : index
    %c0_0 = arith.constant 0 : index
    %0 = vector.load %arg0[%c0, %c0_0] : memref<1x200xf32, #tpu.memory_space<vmem>>, vector<1x200xf32>
    %cst = arith.constant dense<0xFF800000> : vector<1xf32>
    %1 = vector.multi_reduction <maximumf>, %0, %cst [1] : vector<1x200xf32> to vector<1xf32>
    %2 = vector.shape_cast %1 : vector<1xf32> to vector<1x1xf32>
    %3 = vector.broadcast %2 : vector<1x1xf32> to vector<1x200xf32>
    %4 = arith.subf %0, %3 : vector<1x200xf32>
    %5 = math.exp %4 : vector<1x200xf32>
    %cst_1 = arith.constant dense<0.000000e+00> : vector<1xf32>
    %6 = vector.multi_reduction <add>, %5, %cst_1 [1] : vector<1x200xf32> to vector<1xf32>
    %7 = vector.shape_cast %6 : vector<1xf32> to vector<1x1xf32>
    %c0_2 = arith.constant 0 : index
    %c97 = arith.constant 97 : index
    %8 = vector.load %arg0[%c0_2, %c97] : memref<1x200xf32, #tpu.memory_space<vmem>>, vector<1x8xf32>
    %9 = vector.broadcast %2 : vector<1x1xf32> to vector<1x8xf32>
    %10 = arith.subf %8, %9 : vector<1x8xf32>
    %11 = math.exp %10 : vector<1x8xf32>
    %12 = vector.broadcast %7 : vector<1x1xf32> to vector<1x8xf32>
    %13 = arith.divf %11, %12 : vector<1x8xf32>
    %c0_3 = arith.constant 0 : index
    %c0_4 = arith.constant 0 : index
    %14 = vector.load %arg1[%c0_3, %c0_4] : memref<64x8xf32, #tpu.memory_space<vmem>>, vector<64x8xf32>
    %15 = vector.broadcast %13 : vector<1x8xf32> to vector<64x8xf32>
    %16 = arith.mulf %14, %15 : vector<64x8xf32>
    %c0_5 = arith.constant 0 : index
    %c0_6 = arith.constant 0 : index
    %17 = vector.load %arg2[%c0_5, %c0_6] : memref<64x8xf32, #tpu.memory_space<vmem>>, vector<64x8xf32>
    tpu.vector_store %arg2[%c0_5, %c0_6], %16 {strides = array<i32>} : memref<64x8xf32, #tpu.memory_space<vmem>>, vector<64x8xf32>,
    return
  }
}

</mosaic_0001>

<llo_original>
// kernel: tpu_custom_call.1
$region0: #{tpu_custom_call.1}
  #allocation0 [shape = 'u32[]', space=smem, size = 0x4, offset = 0x4, fixed_abs, tag = 'smem constant byte address 0x4 - core index']
  #allocation1 [shape = 'u32[144,128]{1,0:T(1,128)}', space=vmem, size = 0x12000, scoped, tag = 'internal scratch']
  %s0 = inlined_call_operand.vmem [shape: f32[1,200], index: 0, kind: input, shape index: {}]
  %s1 = inlined_call_operand.vmem [shape: f32[64,8], index: 1, kind: input, shape index: {}]
  %s2 = inlined_call_operand.vmem [shape: f32[64,8], index: 2, kind: output, shape index: {}]
  %s3 = sld [smem:[#allocation0]]
  $region18: #{tpu_custom_call.1} parent=0
    _
  %s5 = ssub.s32 1, %s3
  %s6 = scalar_select 0, %s5, %s3
  // Predicated region
  $region2: #{tpu_custom_call.1} parent=0 // pred_check
    _
  $region3: #{tpu_custom_call.1} parent=0 // pred_check_branch
    %8 = sbr.rel (0) target = $region5
  $region4: #{tpu_custom_call.1} parent=0 // pred_region
    _
  $region5: #{tpu_custom_call.1} parent=0 // pred_fallthru
    _
  // Predicated region
  $region6: #{tpu_custom_call.1} parent=0 // pred_check
    _
  $region7: #{tpu_custom_call.1} parent=0 // pred_check_branch
    %10 = sbr.rel (0) target = $region9
  $region8: #{tpu_custom_call.1} parent=0 // pred_region
    _
  $region9: #{tpu_custom_call.1} parent=0 // pred_fallthru
    _
  %v11 = vld [vmem:[%s0] sm:$0x3]
  %v13 = vlaneseq
  %v14 = vshrl.u32 %v13, 7
  %v15 = vsub.s32 0, %v14
  %v16 = vrot.slane %v11, %v15
  %v17 = vlaneseq
  %v18 = vshrl.u32 %v17, 7
  %v19 = vsub.s32 1, %v18
  %v20 = vrot.slane %v11, %v19
  %vm23 = vcmask 1040384
  %v24 = vsel %vm23, %v16, -inf
  %vm25 = vcmask 581632
  %v26 = vsel %vm25, %v20, -inf
  %v27 = vmax.f32 %v24, %v26
  %28 = vmax.xlane.f32.xlu0 %v27
  %v29 = vpop.xlane.xlu0 %28
  %v31 = vlaneseq
  %v32 = vshrl.u32 %v31, 7
  %v33 = vsub.s32 0, %v32
  %v34 = vrot.slane %v29, %v33
  %v36 = vsub.f32 %v11, %v34
  %v37 = vmul.f32 %v36, 1.442695
  %v38 = vpow.pop %v37
  %v40 = vlaneseq
  %v41 = vshrl.u32 %v40, 7
  %v42 = vsub.s32 0, %v41
  %v43 = vrot.slane %v38, %v42
  %v44 = vlaneseq
  %v45 = vshrl.u32 %v44, 7
  %v46 = vsub.s32 1, %v45
  %v47 = vrot.slane %v38, %v46
  %v50 = vsel %vm23, %v43, 0.0
  %v51 = vsel %vm25, %v47, 0.0
  %v52 = vadd.f32 %v50, %v51
  %53 = vadd.xlane.f32.xlu0 %v52
  %v54 = vpop.xlane.xlu0 %53
  %v55 = vld [vmem:[%s0] sm:$0x1]
  %v56 = vsub.f32 %v55, %v29
  %v57 = vmul.f32 %v56, 1.442695
  %v58 = vpow.pop %v57
  %v59 = vrcp.pop %v54
  %v60 = vmul.f32 %v58, %v59
  %v61 = vld [vmem:[%s1] sm:$0xff]
  %v62 = vld [vmem:[%s1 + $0x8] sm:$0xff]
  %v63 = vld [vmem:[%s1 + $0x10] sm:$0xff]
  %v64 = vld [vmem:[%s1 + $0x18] sm:$0xff]
  %v65 = vld [vmem:[%s1 + $0x20] sm:$0xff]
  %v66 = vld [vmem:[%s1 + $0x28] sm:$0xff]
  %v67 = vld [vmem:[%s1 + $0x30] sm:$0xff]
  %v68 = vld [vmem:[%s1 + $0x38] sm:$0xff]
  %v70 = vlaneseq
  %v71 = vshrl.u32 %v70, 7
  %v72 = vsub.s32 0, %v71
  %v73 = vrot.slane %v60, %v72
  %74 = vrot.lane.b32.xlu0 %v73, 31
  %v75 = vpop.permute.xlu0 %74
  %v77 = vmul.f32 %v61, %v75
  %v78 = vmul.f32 %v62, %v75
  %v79 = vmul.f32 %v63, %v75
  %v80 = vmul.f32 %v64, %v75
  %v81 = vmul.f32 %v65, %v75
  %v82 = vmul.f32 %v66, %v75
  %v83 = vmul.f32 %v67, %v75
  %v84 = vmul.f32 %v68, %v75
  %vm85 = vcmask 64512
  %86 = vst.msk [vmem:[%s2] sm:$0xff] %vm85, %v77
  %87 = vst.msk [vmem:[%s2 + $0x8] sm:$0xff] %vm85, %v78
  %88 = vst.msk [vmem:[%s2 + $0x10] sm:$0xff] %vm85, %v79
  %89 = vst.msk [vmem:[%s2 + $0x18] sm:$0xff] %vm85, %v80
  %90 = vst.msk [vmem:[%s2 + $0x20] sm:$0xff] %vm85, %v81
  %91 = vst.msk [vmem:[%s2 + $0x28] sm:$0xff] %vm85, %v82
  %92 = vst.msk [vmem:[%s2 + $0x30] sm:$0xff] %vm85, %v83
  %93 = vst.msk [vmem:[%s2 + $0x38] sm:$0xff] %vm85, %v84
  // Predicated region
  $region10: #{tpu_custom_call.1} parent=0 // pred_check
    _
  $region11: #{tpu_custom_call.1} parent=0 // pred_check_branch
    %95 = sbr.rel (0) target = $region13
  $region12: #{tpu_custom_call.1} parent=0 // pred_region
    _
  $region13: #{tpu_custom_call.1} parent=0 // pred_fallthru
    _
  // Predicated region
  $region14: #{tpu_custom_call.1} parent=0 // pred_check
    _
  $region15: #{tpu_custom_call.1} parent=0 // pred_check_branch
    %97 = sbr.rel (0) target = $region17
  $region16: #{tpu_custom_call.1} parent=0 // pred_region
    _
  $region17: #{tpu_custom_call.1} parent=0 // pred_fallthru
    _

</llo_original>
